<compile_context>
chip_gen: v5e
topology: v5e:2x2
jax: 0.10.0
libtpu: 0.0.40
codegen_flags: <defaults>
</compile_context>

<pallas_src>
import functools

import jax
import jax.numpy as jnp
from jax import lax
from jax.experimental import pallas as pl
from jax.experimental.pallas import tpu as pltpu

_PAD_C = 8   # coordinate channels zero-padded 3 -> 8 (dot/norm stay exact)
_SUB = 8     # sublanes per vreg: FPS working set laid out as (8, N/8)


def _index_bits(n):
    return max(1, (n - 1).bit_length())


def _zgroup_kernel(xyz_t_ref, xyz_row_ref, planes_ref, ctr_ref, idx_ref,
                   dmat_ref, cen_s_ref, idx_s_ref, *, num_group, group_size):
    """Per-batch fused FPS -> kNN -> greedy-morton kernel.

    xyz_t_ref   : (1, 8, N)    lane-major coords (rows 3..7 zero) for MXU dots
    xyz_row_ref : (1, N, 8)    row-major coords (O(1) dynamic point gather)
    planes_ref  : (1, 24, N/8) per-channel sublane-dense planes (FPS VPU path)
    ctr_ref     : (1, G, 8)    OUT: morton-sorted centers (lane-dense, pad 3->8)
    idx_ref     : (1, G, M)    OUT: morton-sorted kNN indices
    dmat_ref    : (G, G)       scratch: center<->center squared distances
    cen_s_ref   : (G, 8)       scratch: unsorted centers
    idx_s_ref   : (G, M)       scratch: unsorted kNN indices
    """
    G, M = num_group, group_size
    N = xyz_t_ref.shape[2]
    NP = N // _SUB

    i32_inf = jnp.int32(2 ** 31 - 1)
    n_bits = _index_bits(N)
    n_mask = (1 << n_bits) - 1
    keep_hi = jnp.int32(~n_mask)
    g_bits = _index_bits(G)
    g_mask = (1 << g_bits) - 1
    keep_hi_g = jnp.int32(~g_mask)

    # per-channel sublane-dense planes for the serial FPS chain
    xp = planes_ref[0, 0:_SUB, :]                                # (8, NP)
    yp = planes_ref[0, _SUB:2 * _SUB, :]
    zp = planes_ref[0, 2 * _SUB:3 * _SUB, :]
    x_sq_p = xp * xp + yp * yp + zp * zp                         # (8, NP)
    idx_p = (lax.broadcasted_iota(jnp.int32, (_SUB, NP), 0) * NP
             + lax.broadcasted_iota(jnp.int32, (_SUB, NP), 1))   # point id = s*NP + l
    inv_idx_p = n_mask - idx_p          # inverted id: max-reduce ties -> lowest id

    # ---- 1. farthest point sampling (serial chain, start at point 0) -------
    def fps_body(i, carry):
        cur, mind = carry
        sel = xyz_row_ref[0, pl.ds(cur, 1), :]                   # (1, 8) row gather
        cen_s_ref[pl.ds(i, 1), :] = sel                          # direct dynamic-row store
        sx, sy, sz = sel[:, 0:1], sel[:, 1:2], sel[:, 2:3]       # (1, 1) each
        cross = sx * xp + sy * yp + sz * zp                      # 3 VPU FMAs (no MXU)
        d = jnp.maximum(x_sq_p + (sx * sx + sy * sy + sz * sz) - 2.0 * cross, 0.0)
        mind = jnp.minimum(mind, d)
        # packed (distance | inverted-index) key -> single cross-lane reduce
        key = (pltpu.bitcast(mind, jnp.int32) & keep_hi) | inv_idx_p
        nxt = jnp.int32(n_mask) - (jnp.max(key) & jnp.int32(n_mask))
        return nxt, mind

    _ = lax.fori_loop(
        0, G, fps_body,
        (jnp.int32(0), jnp.full((_SUB, NP), jnp.inf, jnp.float32)))

    # ---- 2. kNN: M smallest squared distances per center (MXU expansion) ---
    cen = cen_s_ref[...]                                         # (G, 8)
    x_t = xyz_t_ref[0]                                           # (8, N)
    x_sq = jnp.sum(x_t * x_t, axis=0, keepdims=True)             # (1, N)
    c_sq = jnp.sum(cen * cen, axis=1, keepdims=True)             # (G, 1)
    dist = jnp.maximum(
        c_sq + x_sq - 2.0 * jnp.dot(cen, x_t, preferred_element_type=jnp.float32),
        0.0)                                                     # (G, N)

    lane_gn = lax.broadcasted_iota(jnp.int32, (G, N), 1)
    col_gm = lax.broadcasted_iota(jnp.int32, (G, M), 1)
    # packed key matrix; keys are unique per row (index embedded), so the
    # winner invalidation is a single compare/select on the same key.
    keys0 = (pltpu.bitcast(dist, jnp.int32) & keep_hi) | lane_gn
    # TODO(synk): for very large N, tile N with a streaming top-M merge instead
    # of holding the full (G, N) key block resident (matters on v7x 64 MiB VMEM).
    # TODO(synk): on v6e/v7x a bf16 distance key would halve VPU/XLU traffic here.

    def knn_body(k, carry):
        keys, idx = carry
        minkey = jnp.min(keys, axis=-1, keepdims=True)           # one reduce per k
        idx = jnp.where(col_gm == k, minkey & jnp.int32(n_mask), idx)
        keys = jnp.where(keys == minkey, i32_inf, keys)          # invalidate winner
        return keys, idx

    _, idx = lax.fori_loop(0, M, knn_body,
                           (keys0, jnp.zeros((G, M), jnp.int32)),
                           unroll=min(8, M))
    idx_s_ref[...] = idx

    # ---- 3. simplified morton sorting: greedy NN tour over centers ---------
    cen_t = jnp.transpose(cen)                                   # (8, G)
    gram = jnp.dot(cen, cen_t, preferred_element_type=jnp.float32)  # (G, G) MXU
    c_sq_row = jnp.sum(cen_t * cen_t, axis=0, keepdims=True)     # (1, G) == diag(gram)
    # full clamped ||c_i - c_j||^2 so the bitcast int32 key stays non-negative
    dmat_ref[...] = jnp.maximum(c_sq + c_sq_row - 2.0 * gram, 0.0)

    lane_g = lax.broadcasted_iota(jnp.int32, (1, G), 1)

    # tour position 0 is center 0
    ctr_ref[0, 0:1, :] = cen[0:1, :]
    idx_ref[0, 0:1, :] = idx[0:1, :]

    def morton_body(i, carry):
        cur, used = carry
        row = dmat_ref[pl.ds(cur, 1), :]                         # (1, G) row gather
        key = jnp.where(used > 0, i32_inf,
                        (pltpu.bitcast(row, jnp.int32) & keep_hi_g) | lane_g)
        nxt = jnp.min(key) & jnp.int32(g_mask)
        used = used | (lane_g == nxt).astype(jnp.int32)
        # direct dynamic-row stores into the outputs (no carried scatters)
        ctr_ref[0, pl.ds(i, 1), :] = cen_s_ref[pl.ds(nxt, 1), :]
        idx_ref[0, pl.ds(i, 1), :] = idx_s_ref[pl.ds(nxt, 1), :]
        return nxt, used

    _ = lax.fori_loop(1, G, morton_body,
                      (jnp.int32(0), (lane_g == 0).astype(jnp.int32)))


def _vmem_limit_bytes(N, G, M, NP):
    def pad(x, m):
        return ((x + m - 1) // m) * m
    f32 = 4
    inputs = 2 * f32 * (_PAD_C * pad(N, 128)        # (8, N) lane-major, double-buffered
                        + pad(N, _SUB) * 128        # (N, 8) row-gather, lane-padded
                        + 3 * _SUB * pad(NP, 128))  # (24, N/8) planes
    work = f32 * (3 * pad(G, _SUB) * pad(N, 128)    # dist + packed keys + temps
                  + pad(G, _SUB) * pad(G, 128)      # dmat
                  + 4 * pad(G, _SUB) * 128)         # cen_s / idx_s / outputs
    est = inputs + work
    # leave headroom; cap below v7x's 64 MiB physical VMEM
    return int(min(max(2 * est, 16 * 1024 * 1024), 64 * 1024 * 1024))


def zgroup(pts, num_group, group_size):
    """JAX/Pallas equivalent of ReConV2 ZGroup.forward."""
    pts = pts.astype(jnp.float32)
    B, N, C = pts.shape
    G, M = num_group, group_size
    assert N % _SUB == 0, "num_points must be a multiple of 8"
    NP = N // _SUB

    xyz = pts[:, :, :3]
    # three coordinate layouts prepared once by XLA (DMA cost is negligible vs.
    # the serial in-kernel phases):
    #   (B, N, 8)  : O(1) dynamic point gather for FPS
    #   (B, 8, N)  : lane-major operand of the big kNN MXU dot
    #   (B, 24, N/8): per-channel sublane-dense planes for the FPS VPU path
    # TODO(synk): on v7x, pack the (N, 8) gather copy 16-points-per-row and
    # derive the (8, N) view in-kernel to cut the lane-padded VMEM footprint.
    xyz8 = jnp.concatenate(
        [xyz, jnp.zeros((B, N, _PAD_C - 3), jnp.float32)], axis=-1)  # (B, N, 8)
    xyz8_t = jnp.transpose(xyz8, (0, 2, 1))                          # (B, 8, N)
    planes = jnp.transpose(xyz, (0, 2, 1)).reshape(B, 3 * _SUB, NP)  # (B, 24, N/8)

    kernel = functools.partial(_zgroup_kernel, num_group=G, group_size=M)
    centers8, idx = pl.pallas_call(
        kernel,
        out_shape=(jax.ShapeDtypeStruct((B, G, _PAD_C), jnp.float32),
                   jax.ShapeDtypeStruct((B, G, M), jnp.int32)),
        grid=(B,),
        in_specs=[pl.BlockSpec((1, _PAD_C, N), lambda b: (b, 0, 0)),
                  pl.BlockSpec((1, N, _PAD_C), lambda b: (b, 0, 0)),
                  pl.BlockSpec((1, 3 * _SUB, NP), lambda b: (b, 0, 0))],
        out_specs=(pl.BlockSpec((1, G, _PAD_C), lambda b: (b, 0, 0)),
                   pl.BlockSpec((1, G, M), lambda b: (b, 0, 0))),
        scratch_shapes=[pltpu.VMEM((G, G), jnp.float32),
                        pltpu.VMEM((G, _PAD_C), jnp.float32),
                        pltpu.VMEM((G, M), jnp.int32)],
        compiler_params=pltpu.CompilerParams(
            # TODO(synk): on v7x consider CORE_PARALLEL on the batch axis to
            # shard the serial per-batch chains across the two TensorCores.
            dimension_semantics=("parallel",),
            vmem_limit_bytes=_vmem_limit_bytes(N, G, M, NP)),
    )(xyz8_t, xyz8, planes)

    centers = centers8[..., :3]                                      # (B, G, 3)

    # TODO(synk): data-dependent neighborhood row gather (pts[idx]) stays in
    # JAX (XLA gather); no clean BlockSpec form without idx-driven DMA.
    neighborhood = jax.vmap(lambda p, i: p[i])(pts, idx)             # (B, G, M, C)

    # Re-center only the xyz channels; fused by XLA into the gather epilogue.
    nb_xyz = neighborhood[..., :3] - centers[:, :, None, :]
    if C > 3:
        neighborhood = jnp.concatenate([nb_xyz, neighborhood[..., 3:]], axis=-1)
    else:
        neighborhood = nb_xyz
    return neighborhood, centers


if __name__ == "__main__":
    key = jax.random.PRNGKey(0)
    B, N, C = 2, 64, 6          # pts: B N 6 (xyz + extra features)
    num_group, group_size = 8, 8
    pts = jax.random.normal(key, (B, N, C), dtype=jnp.float32)

    neighborhood, center = zgroup(pts, num_group, group_size)
    neighborhood, center = jax.block_until_ready((neighborhood, center))

    assert neighborhood.shape == (B, num_group, group_size, C)
    assert center.shape == (B, num_group, 3)
    assert neighborhood.dtype == jnp.float32 and center.dtype == jnp.float32
    print("KERNEL_OK")
</pallas_src>

<mosaic_0001>
module attributes {stable_mosaic.version = 11 : i64} {
  func.func @_zgroup_kernel(%arg0: i32, %arg1: memref<1x8x64xf32, #tpu.memory_space<vmem>>, %arg2: memref<1x64x8xf32, #tpu.memory_space<vmem>>, %arg3: memref<1x24x8xf32, #tpu.memory_space<vmem>>, %arg4: memref<1x8x8xf32, #tpu.memory_space<vmem>>, %arg5: memref<1x8x8xi32, #tpu.memory_space<vmem>>, %arg6: memref<8x8xf32, #tpu.memory_space<vmem>>, %arg7: memref<8x8xf32, #tpu.memory_space<vmem>>, %arg8: memref<8x8xi32, #tpu.memory_space<vmem>>) attributes {dimension_semantics = [#tpu.dimension_semantics<parallel>], iteration_bounds = array<i64: 2>, scalar_prefetch = 0 : i64, scratch_operands = 3 : i64, tpu.core_type = #tpu.core_type<tc>, window_params = [{transform_indices = @transform_0, window_bounds = array<i64: 1, 8, 64>}, {transform_indices = @transform_1, window_bounds = array<i64: 1, 64, 8>}, {transform_indices = @transform_2, window_bounds = array<i64: 1, 24, 8>}, {transform_indices = @transform_3, window_bounds = array<i64: 1, 8, 8>}, {transform_indices = @transform_4, window_bounds = array<i64: 1, 8, 8>}]} {
    %c0 = arith.constant 0 : index
    %c0_0 = arith.constant 0 : index
    %c0_1 = arith.constant 0 : index
    %0 = vector.load %arg3[%c0, %c0_0, %c0_1] : memref<1x24x8xf32, #tpu.memory_space<vmem>>, vector<1x8x8xf32>
    %1 = vector.shape_cast %0 : vector<1x8x8xf32> to vector<8x8xf32>
    %c0_2 = arith.constant 0 : index
    %c8 = arith.constant 8 : index
    %c0_3 = arith.constant 0 : index
    %2 = vector.load %arg3[%c0_2, %c8, %c0_3] : memref<1x24x8xf32, #tpu.memory_space<vmem>>, vector<1x8x8xf32>
    %3 = vector.shape_cast %2 : vector<1x8x8xf32> to vector<8x8xf32>
    %c0_4 = arith.constant 0 : index
    %c16 = arith.constant 16 : index
    %c0_5 = arith.constant 0 : index
    %4 = vector.load %arg3[%c0_4, %c16, %c0_5] : memref<1x24x8xf32, #tpu.memory_space<vmem>>, vector<1x8x8xf32>
    %5 = vector.shape_cast %4 : vector<1x8x8xf32> to vector<8x8xf32>
    %6 = arith.mulf %1, %1 : vector<8x8xf32>
    %7 = arith.mulf %3, %3 : vector<8x8xf32>
    %8 = arith.addf %6, %7 : vector<8x8xf32>
    %9 = arith.mulf %5, %5 : vector<8x8xf32>
    %10 = arith.addf %8, %9 : vector<8x8xf32>
    %11 = tpu.iota {dimensions = array<i32: 0>} : vector<8x8xi32>
    %c8_i32 = arith.constant 8 : i32
    %12 = vector.broadcast %c8_i32 : i32 to vector<8x8xi32>
    %13 = arith.muli %11, %12 : vector<8x8xi32>
    %14 = tpu.iota {dimensions = array<i32: 1>} : vector<8x8xi32>
    %15 = arith.addi %13, %14 : vector<8x8xi32>
    %c63_i32 = arith.constant 63 : i32
    %16 = vector.broadcast %c63_i32 : i32 to vector<8x8xi32>
    %17 = arith.subi %16, %15 : vector<8x8xi32>
    %cst = arith.constant 0x7F800000 : f32
    %18 = vector.broadcast %cst : f32 to vector<8x8xf32>
    %c-64_i32 = arith.constant -64 : i32
    %c0_i32 = arith.constant 0 : i32
    %c0_i32_6 = arith.constant 0 : i32
    %c8_i32_7 = arith.constant 8 : i32
    %19 = arith.addi %c0_i32_6, %c8_i32_7 : i32
    %c1_i32 = arith.constant 1 : i32
    %20:2 = scf.for %arg9 = %c0_i32_6 to %19 step %c1_i32 iter_args(%arg10 = %c0_i32, %arg11 = %18) -> (i32, vector<8x8xf32>)  : i32 {
      %c0_61 = arith.constant 0 : index
      %179 = arith.index_cast %arg10 : i32 to index
      %c0_62 = arith.constant 0 : index
      %180 = vector.load %arg2[%c0_61, %179, %c0_62] : memref<1x64x8xf32, #tpu.memory_space<vmem>>, vector<1x1x8xf32>
      %181 = vector.shape_cast %180 : vector<1x1x8xf32> to vector<1x8xf32>
      %182 = arith.index_cast %arg9 : i32 to index
      %c0_63 = arith.constant 0 : index
      %183 = vector.load %arg7[%182, %c0_63] : memref<8x8xf32, #tpu.memory_space<vmem>>, vector<1x8xf32>
      tpu.vector_store %arg7[%182, %c0_63], %181 {strides = array<i32>} : memref<8x8xf32, #tpu.memory_space<vmem>>, vector<1x8xf32>,
      %184 = vector.extract_strided_slice %181 {offsets = [0, 0], sizes = [1, 1], strides = [1, 1]} : vector<1x8xf32> to vector<1x1xf32>
      %185 = vector.extract_strided_slice %181 {offsets = [0, 1], sizes = [1, 1], strides = [1, 1]} : vector<1x8xf32> to vector<1x1xf32>
      %186 = vector.extract_strided_slice %181 {offsets = [0, 2], sizes = [1, 1], strides = [1, 1]} : vector<1x8xf32> to vector<1x1xf32>
      %187 = vector.broadcast %184 : vector<1x1xf32> to vector<8x8xf32>
      %188 = arith.mulf %187, %1 : vector<8x8xf32>
      %189 = vector.broadcast %185 : vector<1x1xf32> to vector<8x8xf32>
      %190 = arith.mulf %189, %3 : vector<8x8xf32>
      %191 = arith.addf %188, %190 : vector<8x8xf32>
      %192 = vector.broadcast %186 : vector<1x1xf32> to vector<8x8xf32>
      %193 = arith.mulf %192, %5 : vector<8x8xf32>
      %194 = arith.addf %191, %193 : vector<8x8xf32>
      %195 = arith.mulf %184, %184 : vector<1x1xf32>
      %196 = arith.mulf %185, %185 : vector<1x1xf32>
      %197 = arith.addf %195, %196 : vector<1x1xf32>
      %198 = arith.mulf %186, %186 : vector<1x1xf32>
      %199 = arith.addf %197, %198 : vector<1x1xf32>
      %200 = vector.broadcast %199 : vector<1x1xf32> to vector<8x8xf32>
      %201 = arith.addf %10, %200 : vector<8x8xf32>
      %cst_64 = arith.constant 2.000000e+00 : f32
      %202 = vector.broadcast %cst_64 : f32 to vector<8x8xf32>
      %203 = arith.mulf %202, %194 : vector<8x8xf32>
      %204 = arith.subf %201, %203 : vector<8x8xf32>
      %cst_65 = arith.constant 0.000000e+00 : f32
      %205 = vector.broadcast %cst_65 : f32 to vector<8x8xf32>
      %206 = arith.maximumf %204, %205 : vector<8x8xf32>
      %207 = arith.minimumf %arg11, %206 : vector<8x8xf32>
      %208 = tpu.bitcast %207 : vector<8x8xf32> -> vector<8x8xi32>
      %209 = vector.broadcast %c-64_i32 : i32 to vector<8x8xi32>
      %210 = arith.andi %208, %209 : vector<8x8xi32>
      %211 = arith.ori %210, %17 : vector<8x8xi32>
      %212 = vector.shape_cast %211 : vector<8x8xi32> to vector<1x8x8xi32>
      %cst_66 = arith.constant dense<-2147483648> : vector<1xi32>
      %213 = vector.multi_reduction <maxsi>, %212, %cst_66 [1, 2] : vector<1x8x8xi32> to vector<1xi32>
      %214 = vector.shape_cast %213 : vector<1xi32> to vector<1x1x1xi32>
      %215 = vector.extract %214[0, 0, 0] : i32 from vector<1x1x1xi32>
      %c63_i32_67 = arith.constant 63 : i32
      %216 = arith.andi %215, %c63_i32_67 : i32
      %c63_i32_68 = arith.constant 63 : i32
      %217 = arith.subi %c63_i32_68, %216 : i32
      scf.yield %217, %207 : i32, vector<8x8xf32>
    }
    %c8_i32_8 = arith.constant 8 : i32
    %c0_9 = arith.constant 0 : index
    %c0_10 = arith.constant 0 : index
    %21 = vector.load %arg7[%c0_9, %c0_10] : memref<8x8xf32, #tpu.memory_space<vmem>>, vector<8x8xf32>
    %c0_11 = arith.constant 0 : index
    %c0_12 = arith.constant 0 : index
    %c0_13 = arith.constant 0 : index
    %22 = vector.load %arg1[%c0_11, %c0_12, %c0_13] : memref<1x8x64xf32, #tpu.memory_space<vmem>>, vector<1x8x64xf32>
    %23 = vector.shape_cast %22 : vector<1x8x64xf32> to vector<8x64xf32>
    %24 = arith.mulf %23, %23 : vector<8x64xf32>
    %cst_14 = arith.constant dense<0.000000e+00> : vector<64xf32>
    %25 = vector.multi_reduction <add>, %24, %cst_14 [0] : vector<8x64xf32> to vector<64xf32>
    %26 = vector.shape_cast %25 : vector<64xf32> to vector<1x64xf32>
    %27 = arith.mulf %21, %21 : vector<8x8xf32>
    %cst_15 = arith.constant dense<0.000000e+00> : vector<8xf32>
    %28 = vector.multi_reduction <add>, %27, %cst_15 [1] : vector<8x8xf32> to vector<8xf32>
    %29 = vector.shape_cast %28 : vector<8xf32> to vector<8x1xf32>
    %30 = vector.broadcast %29 : vector<8x1xf32> to vector<8x64xf32>
    %31 = vector.broadcast %26 : vector<1x64xf32> to vector<8x64xf32>
    %32 = arith.addf %30, %31 : vector<8x64xf32>
    %cst_16 = arith.constant dense<0.000000e+00> : vector<8x64xf32>
    %33 = tpu.matmul %21, %23, %cst_16 {dimension_numbers = #tpu.dot_dimension_numbers<[1], [0], [0], [1], [0, 0, 1, 1], [], []>} : vector<8x8xf32>, vector<8x64xf32>, vector<8x64xf32> -> vector<8x64xf32>
    %cst_17 = arith.constant 2.000000e+00 : f32
    %34 = vector.broadcast %cst_17 : f32 to vector<8x64xf32>
    %35 = arith.mulf %34, %33 : vector<8x64xf32>
    %36 = arith.subf %32, %35 : vector<8x64xf32>
    %cst_18 = arith.constant 0.000000e+00 : f32
    %37 = vector.broadcast %cst_18 : f32 to vector<8x64xf32>
    %38 = arith.maximumf %36, %37 : vector<8x64xf32>
    %39 = tpu.iota {dimensions = array<i32: 1>} : vector<8x64xi32>
    %40 = tpu.iota {dimensions = array<i32: 1>} : vector<8x8xi32>
    %41 = tpu.bitcast %38 : vector<8x64xf32> -> vector<8x64xi32>
    %c-64_i32_19 = arith.constant -64 : i32
    %42 = vector.broadcast %c-64_i32_19 : i32 to vector<8x64xi32>
    %43 = arith.andi %41, %42 : vector<8x64xi32>
    %44 = arith.ori %43, %39 : vector<8x64xi32>
    %c0_i32_20 = arith.constant 0 : i32
    %45 = vector.broadcast %c0_i32_20 : i32 to vector<8x8xi32>
    %c2147483647_i32 = arith.constant 2147483647 : i32
    %c0_i32_21 = arith.constant 0 : i32
    %cst_22 = arith.constant dense<2147483647> : vector<8xi32>
    %46 = vector.multi_reduction <minsi>, %44, %cst_22 [1] : vector<8x64xi32> to vector<8xi32>
    %47 = vector.shape_cast %46 : vector<8xi32> to vector<8x1xi32>
    %48 = vector.broadcast %c0_i32_21 : i32 to vector<8x8xi32>
    %49 = arith.cmpi eq, %40, %48 : vector<8x8xi32>
    %c63_i32_23 = arith.constant 63 : i32
    %50 = vector.broadcast %c63_i32_23 : i32 to vector<8x1xi32>
    %51 = arith.andi %47, %50 : vector<8x1xi32>
    %52 = vector.shape_cast %51 : vector<8x1xi32> to vector<8x1xi32>
    %53 = vector.broadcast %52 : vector<8x1xi32> to vector<8x8xi32>
    %54 = arith.select %49, %53, %45 : vector<8x8xi1>, vector<8x8xi32>
    %55 = vector.broadcast %47 : vector<8x1xi32> to vector<8x64xi32>
    %56 = arith.cmpi eq, %44, %55 : vector<8x64xi32>
    %57 = vector.broadcast %c2147483647_i32 : i32 to vector<8x64xi32>
    %58 = arith.select %56, %57, %44 : vector<8x64xi1>, vector<8x64xi32>
    %c1_i32_24 = arith.constant 1 : i32
    %cst_25 = arith.constant dense<2147483647> : vector<8xi32>
    %59 = vector.multi_reduction <minsi>, %58, %cst_25 [1] : vector<8x64xi32> to vector<8xi32>
    %60 = vector.shape_cast %59 : vector<8xi32> to vector<8x1xi32>
    %61 = vector.broadcast %c1_i32_24 : i32 to vector<8x8xi32>
    %62 = arith.cmpi eq, %40, %61 : vector<8x8xi32>
    %c63_i32_26 = arith.constant 63 : i32
    %63 = vector.broadcast %c63_i32_26 : i32 to vector<8x1xi32>
    %64 = arith.andi %60, %63 : vector<8x1xi32>
    %65 = vector.shape_cast %64 : vector<8x1xi32> to vector<8x1xi32>
    %66 = vector.broadcast %65 : vector<8x1xi32> to vector<8x8xi32>
    %67 = arith.select %62, %66, %54 : vector<8x8xi1>, vector<8x8xi32>
    %68 = vector.broadcast %60 : vector<8x1xi32> to vector<8x64xi32>
    %69 = arith.cmpi eq, %58, %68 : vector<8x64xi32>
    %70 = vector.broadcast %c2147483647_i32 : i32 to vector<8x64xi32>
    %71 = arith.select %69, %70, %58 : vector<8x64xi1>, vector<8x64xi32>
    %c2_i32 = arith.constant 2 : i32
    %cst_27 = arith.constant dense<2147483647> : vector<8xi32>
    %72 = vector.multi_reduction <minsi>, %71, %cst_27 [1] : vector<8x64xi32> to vector<8xi32>
    %73 = vector.shape_cast %72 : vector<8xi32> to vector<8x1xi32>
    %74 = vector.broadcast %c2_i32 : i32 to vector<8x8xi32>
    %75 = arith.cmpi eq, %40, %74 : vector<8x8xi32>
    %c63_i32_28 = arith.constant 63 : i32
    %76 = vector.broadcast %c63_i32_28 : i32 to vector<8x1xi32>
    %77 = arith.andi %73, %76 : vector<8x1xi32>
    %78 = vector.shape_cast %77 : vector<8x1xi32> to vector<8x1xi32>
    %79 = vector.broadcast %78 : vector<8x1xi32> to vector<8x8xi32>
    %80 = arith.select %75, %79, %67 : vector<8x8xi1>, vector<8x8xi32>
    %81 = vector.broadcast %73 : vector<8x1xi32> to vector<8x64xi32>
    %82 = arith.cmpi eq, %71, %81 : vector<8x64xi32>
    %83 = vector.broadcast %c2147483647_i32 : i32 to vector<8x64xi32>
    %84 = arith.select %82, %83, %71 : vector<8x64xi1>, vector<8x64xi32>
    %c3_i32 = arith.constant 3 : i32
    %cst_29 = arith.constant dense<2147483647> : vector<8xi32>
    %85 = vector.multi_reduction <minsi>, %84, %cst_29 [1] : vector<8x64xi32> to vector<8xi32>
    %86 = vector.shape_cast %85 : vector<8xi32> to vector<8x1xi32>
    %87 = vector.broadcast %c3_i32 : i32 to vector<8x8xi32>
    %88 = arith.cmpi eq, %40, %87 : vector<8x8xi32>
    %c63_i32_30 = arith.constant 63 : i32
    %89 = vector.broadcast %c63_i32_30 : i32 to vector<8x1xi32>
    %90 = arith.andi %86, %89 : vector<8x1xi32>
    %91 = vector.shape_cast %90 : vector<8x1xi32> to vector<8x1xi32>
    %92 = vector.broadcast %91 : vector<8x1xi32> to vector<8x8xi32>
    %93 = arith.select %88, %92, %80 : vector<8x8xi1>, vector<8x8xi32>
    %94 = vector.broadcast %86 : vector<8x1xi32> to vector<8x64xi32>
    %95 = arith.cmpi eq, %84, %94 : vector<8x64xi32>
    %96 = vector.broadcast %c2147483647_i32 : i32 to vector<8x64xi32>
    %97 = arith.select %95, %96, %84 : vector<8x64xi1>, vector<8x64xi32>
    %c4_i32 = arith.constant 4 : i32
    %cst_31 = arith.constant dense<2147483647> : vector<8xi32>
    %98 = vector.multi_reduction <minsi>, %97, %cst_31 [1] : vector<8x64xi32> to vector<8xi32>
    %99 = vector.shape_cast %98 : vector<8xi32> to vector<8x1xi32>
    %100 = vector.broadcast %c4_i32 : i32 to vector<8x8xi32>
    %101 = arith.cmpi eq, %40, %100 : vector<8x8xi32>
    %c63_i32_32 = arith.constant 63 : i32
    %102 = vector.broadcast %c63_i32_32 : i32 to vector<8x1xi32>
    %103 = arith.andi %99, %102 : vector<8x1xi32>
    %104 = vector.shape_cast %103 : vector<8x1xi32> to vector<8x1xi32>
    %105 = vector.broadcast %104 : vector<8x1xi32> to vector<8x8xi32>
    %106 = arith.select %101, %105, %93 : vector<8x8xi1>, vector<8x8xi32>
    %107 = vector.broadcast %99 : vector<8x1xi32> to vector<8x64xi32>
    %108 = arith.cmpi eq, %97, %107 : vector<8x64xi32>
    %109 = vector.broadcast %c2147483647_i32 : i32 to vector<8x64xi32>
    %110 = arith.select %108, %109, %97 : vector<8x64xi1>, vector<8x64xi32>
    %c5_i32 = arith.constant 5 : i32
    %cst_33 = arith.constant dense<2147483647> : vector<8xi32>
    %111 = vector.multi_reduction <minsi>, %110, %cst_33 [1] : vector<8x64xi32> to vector<8xi32>
    %112 = vector.shape_cast %111 : vector<8xi32> to vector<8x1xi32>
    %113 = vector.broadcast %c5_i32 : i32 to vector<8x8xi32>
    %114 = arith.cmpi eq, %40, %113 : vector<8x8xi32>
    %c63_i32_34 = arith.constant 63 : i32
    %115 = vector.broadcast %c63_i32_34 : i32 to vector<8x1xi32>
    %116 = arith.andi %112, %115 : vector<8x1xi32>
    %117 = vector.shape_cast %116 : vector<8x1xi32> to vector<8x1xi32>
    %118 = vector.broadcast %117 : vector<8x1xi32> to vector<8x8xi32>
    %119 = arith.select %114, %118, %106 : vector<8x8xi1>, vector<8x8xi32>
    %120 = vector.broadcast %112 : vector<8x1xi32> to vector<8x64xi32>
    %121 = arith.cmpi eq, %110, %120 : vector<8x64xi32>
    %122 = vector.broadcast %c2147483647_i32 : i32 to vector<8x64xi32>
    %123 = arith.select %121, %122, %110 : vector<8x64xi1>, vector<8x64xi32>
    %c6_i32 = arith.constant 6 : i32
    %cst_35 = arith.constant dense<2147483647> : vector<8xi32>
    %124 = vector.multi_reduction <minsi>, %123, %cst_35 [1] : vector<8x64xi32> to vector<8xi32>
    %125 = vector.shape_cast %124 : vector<8xi32> to vector<8x1xi32>
    %126 = vector.broadcast %c6_i32 : i32 to vector<8x8xi32>
    %127 = arith.cmpi eq, %40, %126 : vector<8x8xi32>
    %c63_i32_36 = arith.constant 63 : i32
    %128 = vector.broadcast %c63_i32_36 : i32 to vector<8x1xi32>
    %129 = arith.andi %125, %128 : vector<8x1xi32>
    %130 = vector.shape_cast %129 : vector<8x1xi32> to vector<8x1xi32>
    %131 = vector.broadcast %130 : vector<8x1xi32> to vector<8x8xi32>
    %132 = arith.select %127, %131, %119 : vector<8x8xi1>, vector<8x8xi32>
    %133 = vector.broadcast %125 : vector<8x1xi32> to vector<8x64xi32>
    %134 = arith.cmpi eq, %123, %133 : vector<8x64xi32>
    %135 = vector.broadcast %c2147483647_i32 : i32 to vector<8x64xi32>
    %136 = arith.select %134, %135, %123 : vector<8x64xi1>, vector<8x64xi32>
    %c7_i32 = arith.constant 7 : i32
    %cst_37 = arith.constant dense<2147483647> : vector<8xi32>
    %137 = vector.multi_reduction <minsi>, %136, %cst_37 [1] : vector<8x64xi32> to vector<8xi32>
    %138 = vector.shape_cast %137 : vector<8xi32> to vector<8x1xi32>
    %139 = vector.broadcast %c7_i32 : i32 to vector<8x8xi32>
    %140 = arith.cmpi eq, %40, %139 : vector<8x8xi32>
    %c63_i32_38 = arith.constant 63 : i32
    %141 = vector.broadcast %c63_i32_38 : i32 to vector<8x1xi32>
    %142 = arith.andi %138, %141 : vector<8x1xi32>
    %143 = vector.shape_cast %142 : vector<8x1xi32> to vector<8x1xi32>
    %144 = vector.broadcast %143 : vector<8x1xi32> to vector<8x8xi32>
    %145 = arith.select %140, %144, %132 : vector<8x8xi1>, vector<8x8xi32>
    %146 = vector.broadcast %138 : vector<8x1xi32> to vector<8x64xi32>
    %147 = arith.cmpi eq, %136, %146 : vector<8x64xi32>
    %148 = vector.broadcast %c2147483647_i32 : i32 to vector<8x64xi32>
    %149 = arith.select %147, %148, %136 : vector<8x64xi1>, vector<8x64xi32>
    %c8_i32_39 = arith.constant 8 : i32
    %c0_40 = arith.constant 0 : index
    %c0_41 = arith.constant 0 : index
    %150 = vector.load %arg8[%c0_40, %c0_41] : memref<8x8xi32, #tpu.memory_space<vmem>>, vector<8x8xi32>
    tpu.vector_store %arg8[%c0_40, %c0_41], %145 {strides = array<i32>} : memref<8x8xi32, #tpu.memory_space<vmem>>, vector<8x8xi32>,
    %151 = tpu.transpose %21, [1, 0] : vector<8x8xf32> -> vector<8x8xf32>
    %cst_42 = arith.constant dense<0.000000e+00> : vector<8x8xf32>
    %152 = tpu.matmul %21, %151, %cst_42 {dimension_numbers = #tpu.dot_dimension_numbers<[1], [0], [0], [1], [0, 0, 1, 1], [], []>} : vector<8x8xf32>, vector<8x8xf32>, vector<8x8xf32> -> vector<8x8xf32>
    %153 = arith.mulf %151, %151 : vector<8x8xf32>
    %cst_43 = arith.constant dense<0.000000e+00> : vector<8xf32>
    %154 = vector.multi_reduction <add>, %153, %cst_43 [0] : vector<8x8xf32> to vector<8xf32>
    %155 = vector.shape_cast %154 : vector<8xf32> to vector<1x8xf32>
    %156 = vector.broadcast %29 : vector<8x1xf32> to vector<8x8xf32>
    %157 = vector.broadcast %155 : vector<1x8xf32> to vector<8x8xf32>
    %158 = arith.addf %156, %157 : vector<8x8xf32>
    %cst_44 = arith.constant 2.000000e+00 : f32
    %159 = vector.broadcast %cst_44 : f32 to vector<8x8xf32>
    %160 = arith.mulf %159, %152 : vector<8x8xf32>
    %161 = arith.subf %158, %160 : vector<8x8xf32>
    %cst_45 = arith.constant 0.000000e+00 : f32
    %162 = vector.broadcast %cst_45 : f32 to vector<8x8xf32>
    %163 = arith.maximumf %161, %162 : vector<8x8xf32>
    %c0_46 = arith.constant 0 : index
    %c0_47 = arith.constant 0 : index
    %164 = vector.load %arg6[%c0_46, %c0_47] : memref<8x8xf32, #tpu.memory_space<vmem>>, vector<8x8xf32>
    tpu.vector_store %arg6[%c0_46, %c0_47], %163 {strides = array<i32>} : memref<8x8xf32, #tpu.memory_space<vmem>>, vector<8x8xf32>,
    %165 = tpu.iota {dimensions = array<i32: 1>} : vector<1x8xi32>
    %166 = vector.extract_strided_slice %21 {offsets = [0, 0], sizes = [1, 8], strides = [1, 1]} : vector<8x8xf32> to vector<1x8xf32>
    %c0_48 = arith.constant 0 : index
    %c0_49 = arith.constant 0 : index
    %c0_50 = arith.constant 0 : index
    %167 = vector.load %arg4[%c0_48, %c0_49, %c0_50] : memref<1x8x8xf32, #tpu.memory_space<vmem>>, vector<1x1x8xf32>
    %168 = vector.shape_cast %167 : vector<1x1x8xf32> to vector<1x8xf32>
    %169 = vector.shape_cast %166 : vector<1x8xf32> to vector<1x1x8xf32>
    tpu.vector_store %arg4[%c0_48, %c0_49, %c0_50], %169 {strides = array<i32>} : memref<1x8x8xf32, #tpu.memory_space<vmem>>, vector<1x1x8xf32>,
    %170 = vector.extract_strided_slice %145 {offsets = [0, 0], sizes = [1, 8], strides = [1, 1]} : vector<8x8xi32> to vector<1x8xi32>
    %c0_51 = arith.constant 0 : index
    %c0_52 = arith.constant 0 : index
    %c0_53 = arith.constant 0 : index
    %171 = vector.load %arg5[%c0_51, %c0_52, %c0_53] : memref<1x8x8xi32, #tpu.memory_space<vmem>>, vector<1x1x8xi32>
    %172 = vector.shape_cast %171 : vector<1x1x8xi32> to vector<1x8xi32>
    %173 = vector.shape_cast %170 : vector<1x8xi32> to vector<1x1x8xi32>
    tpu.vector_store %arg5[%c0_51, %c0_52, %c0_53], %173 {strides = array<i32>} : memref<1x8x8xi32, #tpu.memory_space<vmem>>, vector<1x1x8xi32>,
    %c0_i32_54 = arith.constant 0 : i32
    %174 = vector.broadcast %c0_i32_54 : i32 to vector<1x8xi32>
    %175 = arith.cmpi eq, %165, %174 : vector<1x8xi32>
    %176 = arith.extui %175 : vector<1x8xi1> to vector<1x8xi32>
    %c-8_i32 = arith.constant -8 : i32
    %c2147483647_i32_55 = arith.constant 2147483647 : i32
    %c0_i32_56 = arith.constant 0 : i32
    %c1_i32_57 = arith.constant 1 : i32
    %c7_i32_58 = arith.constant 7 : i32
    %177 = arith.addi %c1_i32_57, %c7_i32_58 : i32
    %c1_i32_59 = arith.constant 1 : i32
    %178:2 = scf.for %arg9 = %c1_i32_57 to %177 step %c1_i32_59 iter_args(%arg10 = %c0_i32_56, %arg11 = %176) -> (i32, vector<1x8xi32>)  : i32 {
      %179 = arith.index_cast %arg10 : i32 to index
      %c0_61 = arith.constant 0 : index
      %180 = vector.load %arg6[%179, %c0_61] : memref<8x8xf32, #tpu.memory_space<vmem>>, vector<1x8xf32>
      %c0_i32_62 = arith.constant 0 : i32
      %181 = vector.broadcast %c0_i32_62 : i32 to vector<1x8xi32>
      %182 = arith.cmpi sgt, %arg11, %181 : vector<1x8xi32>
      %183 = tpu.bitcast %180 : vector<1x8xf32> -> vector<1x8xi32>
      %184 = vector.broadcast %c-8_i32 : i32 to vector<1x8xi32>
      %185 = arith.andi %183, %184 : vector<1x8xi32>
      %186 = arith.ori %185, %165 : vector<1x8xi32>
      %187 = vector.broadcast %c2147483647_i32_55 : i32 to vector<1x8xi32>
      %188 = arith.select %182, %187, %186 : vector<1x8xi1>, vector<1x8xi32>
      %189 = vector.shape_cast %188 : vector<1x8xi32> to vector<1x1x8xi32>
      %cst_63 = arith.constant dense<2147483647> : vector<1xi32>
      %190 = vector.multi_reduction <minsi>, %189, %cst_63 [1, 2] : vector<1x1x8xi32> to vector<1xi32>
      %191 = vector.shape_cast %190 : vector<1xi32> to vector<1x1x1xi32>
      %192 = vector.extract %191[0, 0, 0] : i32 from vector<1x1x1xi32>
      %c7_i32_64 = arith.constant 7 : i32
      %193 = arith.andi %192, %c7_i32_64 : i32
      %194 = vector.broadcast %193 : i32 to vector<1x8xi32>
      %195 = arith.cmpi eq, %165, %194 : vector<1x8xi32>
      %196 = arith.extui %195 : vector<1x8xi1> to vector<1x8xi32>
      %197 = arith.ori %arg11, %196 : vector<1x8xi32>
      %198 = arith.index_cast %193 : i32 to index
      %c0_65 = arith.constant 0 : index
      %199 = vector.load %arg7[%198, %c0_65] : memref<8x8xf32, #tpu.memory_space<vmem>>, vector<1x8xf32>
      %c0_66 = arith.constant 0 : index
      %200 = arith.index_cast %arg9 : i32 to index
      %c0_67 = arith.constant 0 : index
      %201 = vector.load %arg4[%c0_66, %200, %c0_67] : memref<1x8x8xf32, #tpu.memory_space<vmem>>, vector<1x1x8xf32>
      %202 = vector.shape_cast %201 : vector<1x1x8xf32> to vector<1x8xf32>
      %203 = vector.shape_cast %199 : vector<1x8xf32> to vector<1x1x8xf32>
      tpu.vector_store %arg4[%c0_66, %200, %c0_67], %203 {strides = array<i32>} : memref<1x8x8xf32, #tpu.memory_space<vmem>>, vector<1x1x8xf32>,
      %204 = arith.index_cast %193 : i32 to index
      %c0_68 = arith.constant 0 : index
      %205 = vector.load %arg8[%204, %c0_68] : memref<8x8xi32, #tpu.memory_space<vmem>>, vector<1x8xi32>
      %c0_69 = arith.constant 0 : index
      %206 = arith.index_cast %arg9 : i32 to index
      %c0_70 = arith.constant 0 : index
      %207 = vector.load %arg5[%c0_69, %206, %c0_70] : memref<1x8x8xi32, #tpu.memory_space<vmem>>, vector<1x1x8xi32>
      %208 = vector.shape_cast %207 : vector<1x1x8xi32> to vector<1x8xi32>
      %209 = vector.shape_cast %205 : vector<1x8xi32> to vector<1x1x8xi32>
      tpu.vector_store %arg5[%c0_69, %206, %c0_70], %209 {strides = array<i32>} : memref<1x8x8xi32, #tpu.memory_space<vmem>>, vector<1x1x8xi32>,
      scf.yield %193, %197 : i32, vector<1x8xi32>
    }
    %c7_i32_60 = arith.constant 7 : i32
    return
  }
  func.func @transform_0(%arg0: i32) -> (i32, i32, i32) {
    %c0_i32 = arith.constant 0 : i32
    %c0_i32_0 = arith.constant 0 : i32
    %c0_i32_1 = arith.constant 0 : i32
    return %arg0, %c0_i32, %c0_i32_0 : i32, i32, i32
  }
  func.func @transform_1(%arg0: i32) -> (i32, i32, i32) {
    %c0_i32 = arith.constant 0 : i32
    %c0_i32_0 = arith.constant 0 : i32
    %c0_i32_1 = arith.constant 0 : i32
    return %arg0, %c0_i32, %c0_i32_0 : i32, i32, i32
  }
  func.func @transform_2(%arg0: i32) -> (i32, i32, i32) {
    %c0_i32 = arith.constant 0 : i32
    %c0_i32_0 = arith.constant 0 : i32
    %c0_i32_1 = arith.constant 0 : i32
    return %arg0, %c0_i32, %c0_i32_0 : i32, i32, i32
  }
  func.func @transform_3(%arg0: i32) -> (i32, i32, i32) {
    %c0_i32 = arith.constant 0 : i32
    %c0_i32_0 = arith.constant 0 : i32
    %c0_i32_1 = arith.constant 0 : i32
    return %arg0, %c0_i32, %c0_i32_0 : i32, i32, i32
  }
  func.func @transform_4(%arg0: i32) -> (i32, i32, i32) {
    %c0_i32 = arith.constant 0 : i32
    %c0_i32_0 = arith.constant 0 : i32
    %c0_i32_1 = arith.constant 0 : i32
    return %arg0, %c0_i32, %c0_i32_0 : i32, i32, i32
  }
}

</mosaic_0001>

<llo_original>
// kernel: tpu_custom_call.1
$region0: #{tpu_custom_call.1}
  #allocation0 [shape = 'u32[]', space=smem, size = 0x4, offset = 0x4, fixed_abs, tag = 'smem constant byte address 0x4 - core index']
  #allocation1 [shape = 'u32[72,128]{1,0:T(1,128)}', space=vmem, size = 0x9000, scoped, tag = 'internal scratch']
  #allocation2 [shape = 'f32[8,8]{1,0:T(8,128)}', space=vmem, size = 0x1000, scoped, tag = 'scratch operand']
  #allocation3 [shape = 'f32[8,8]{1,0:T(8,128)}', space=vmem, size = 0x1000, scoped, tag = 'scratch operand']
  #allocation4 [shape = 's32[8,8]{1,0:T(8,128)}', space=vmem, size = 0x1000, scoped, tag = 'scratch operand']
  %s0 = inlined_call_operand.vmem [shape: f32[2,8,64], index: 0, kind: input, shape index: {}]
  %s1 = inlined_call_operand.vmem [shape: f32[2,64,8], index: 1, kind: input, shape index: {}]
  %s2 = inlined_call_operand.vmem [shape: f32[2,24,8], index: 2, kind: input, shape index: {}]
  %s3 = inlined_call_operand.hbm [shape: f32[2,8,8], index: 3, kind: output, shape index: {0}]
  %s4 = inlined_call_operand.hbm [shape: s32[2,8,8], index: 4, kind: output, shape index: {1}]
  %5 = xla_tuple %s3, %s4
  %s6 = sld [smem:[#allocation0]]
  $region67: #{tpu_custom_call.1} parent=0
    _
  %s8 = ssub.s32 1, %s6
  %s9 = scalar_select 0, %s8, %s6
  $region1: #{tpu_custom_call.1} parent=0
    #allocation5 [shape = 'u8[8192]{0}', space=vmem, size = 0x2000, scoped, tag = 'output window, operand 0']
    #allocation6 [shape = 's32[2]{0}', space=sflag, size = 0x8, scoped, tag = 'scoped memory for tpu_custom_call.1']
    #allocation7 [shape = 'u8[8192]{0}', space=vmem, size = 0x2000, scoped, tag = 'output window, operand 1']
    #allocation8 [shape = 's32[2]{0}', space=sflag, size = 0x8, scoped, tag = 'scoped memory for tpu_custom_call.1']
    %10 = vsyncpa [#allocation6], 0
    %s11 = scalar_lea.sflag [#allocation6], 1
    %12 = vsyncpa %s11, 0
    %13 = vsyncpa [#allocation8], 0
    %s14 = scalar_lea.sflag [#allocation8], 1
    %15 = vsyncpa %s14, 0
    loop: start=0, step=1, limit=4
    $region2: #{tpu_custom_call.1} parent=1 // loop_pre_header
      _
    $region3: #{tpu_custom_call.1} parent=1 // loop_header
      %s17 = sphi 0, %s21
      %p18 = scmp.ge.s32.totalorder %s17, 4
      %s27 = sphi 0, %s29
      %s30 = sphi 0, %s27
      %s31 = sphi 0, %s30
      %s47 = sphi 0, %s31
      %s53 = sphi 0, %s55
      %s56 = sphi 0, %s53
      %s57 = sphi 0, %s56
      %s73 = sphi 0, %s57
      %s79 = sphi 0, %s81
      %s82 = sphi 0, %s79
      %s83 = sphi 0, %s82
      %s99 = sphi 0, %s83
      %s105 = sphi 0, %s107
      %s108 = sphi 0, %s105
      %s109 = sphi 0, %s108
      %s125 = sphi 0, %s109
      %s131 = sphi 0, %s133
      %s134 = sphi 0, %s131
      %s135 = sphi 0, %s134
      %s151 = sphi 0, %s135
    $region4: #{tpu_custom_call.1} parent=1 // loop_header_branch
      %20 = sbr.rel (%p18) target = $region8
    $region5: #{tpu_custom_call.1} parent=1 // loop_body
      %s22 = ssub.s32 %s17, 1
      %s23 = ssub.s32 %s17, 2
      %s24 = sadd.s32 %s17, 1
      %s25 = ssub.s32 %s17, %s24
      %p26 = scmp.eq.s32.totalorder %s25, 0
      %s28 = sadd.s32 %s27, 1
      %s29 = scalar_select %p26, %s27, %s28
      %p32 = pneg %p26
      %p33 = scmp.eq.s32.totalorder %s17, 1
      %p34 = por %p32, %p33
      %p35 = scmp.ne.s32.totalorder %s27, %s30
      %p36 = scmp.eq.s32.totalorder %s17, 0
      %p37 = por %p35, %p36
      %p38 = scmp.ne.s32.totalorder %s27, %s30
      %p39 = scmp.eq.s32.totalorder %s22, 1
      %p40 = por %p38, %p39
      %p41 = scmp.ne.s32.totalorder %s30, %s31
      %p42 = scmp.eq.s32.totalorder %s22, 0
      %p43 = por %p41, %p42
      %p44 = scmp.ne.s32.totalorder %s30, %s31
      %p45 = scmp.eq.s32.totalorder %s23, 1
      %p46 = por %p44, %p45
      %p48 = scmp.ne.s32.totalorder %s31, %s47
      %p49 = scmp.eq.s32.totalorder %s23, 0
      %p50 = por %p48, %p49
      %s51 = ssub.s32 %s17, %s24
      %p52 = scmp.eq.s32.totalorder %s51, 0
      %s54 = sadd.s32 %s53, 1
      %s55 = scalar_select %p52, %s53, %s54
      %p58 = pneg %p52
      %p59 = scmp.eq.s32.totalorder %s17, 1
      %p60 = por %p58, %p59
      %p61 = scmp.ne.s32.totalorder %s53, %s56
      %p62 = scmp.eq.s32.totalorder %s17, 0
      %p63 = por %p61, %p62
      %p64 = scmp.ne.s32.totalorder %s53, %s56
      %p65 = scmp.eq.s32.totalorder %s22, 1
      %p66 = por %p64, %p65
      %p67 = scmp.ne.s32.totalorder %s56, %s57
      %p68 = scmp.eq.s32.totalorder %s22, 0
      %p69 = por %p67, %p68
      %p70 = scmp.ne.s32.totalorder %s56, %s57
      %p71 = scmp.eq.s32.totalorder %s23, 1
      %p72 = por %p70, %p71
      %p74 = scmp.ne.s32.totalorder %s57, %s73
      %p75 = scmp.eq.s32.totalorder %s23, 0
      %p76 = por %p74, %p75
      %s77 = ssub.s32 %s17, %s24
      %p78 = scmp.eq.s32.totalorder %s77, 0
      %s80 = sadd.s32 %s79, 1
      %s81 = scalar_select %p78, %s79, %s80
      %p84 = pneg %p78
      %p85 = scmp.eq.s32.totalorder %s17, 1
      %p86 = por %p84, %p85
      %p87 = scmp.ne.s32.totalorder %s79, %s82
      %p88 = scmp.eq.s32.totalorder %s17, 0
      %p89 = por %p87, %p88
      %p90 = scmp.ne.s32.totalorder %s79, %s82
      %p91 = scmp.eq.s32.totalorder %s22, 1
      %p92 = por %p90, %p91
      %p93 = scmp.ne.s32.totalorder %s82, %s83
      %p94 = scmp.eq.s32.totalorder %s22, 0
      %p95 = por %p93, %p94
      %p96 = scmp.ne.s32.totalorder %s82, %s83
      %p97 = scmp.eq.s32.totalorder %s23, 1
      %p98 = por %p96, %p97
      %p100 = scmp.ne.s32.totalorder %s83, %s99
      %p101 = scmp.eq.s32.totalorder %s23, 0
      %p102 = por %p100, %p101
      %s103 = ssub.s32 %s17, %s24
      %p104 = scmp.eq.s32.totalorder %s103, 0
      %s106 = sadd.s32 %s105, 1
      %s107 = scalar_select %p104, %s105, %s106
      %p110 = pneg %p104
      %p111 = scmp.eq.s32.totalorder %s17, 1
      %p112 = por %p110, %p111
      %p113 = scmp.ne.s32.totalorder %s105, %s108
      %p114 = scmp.eq.s32.totalorder %s17, 0
      %p115 = por %p113, %p114
      %p116 = scmp.ne.s32.totalorder %s105, %s108
      %p117 = scmp.eq.s32.totalorder %s22, 1
      %p118 = por %p116, %p117
      %p119 = scmp.ne.s32.totalorder %s108, %s109
      %p120 = scmp.eq.s32.totalorder %s22, 0
      %p121 = por %p119, %p120
      %p122 = scmp.ne.s32.totalorder %s108, %s109
      %p123 = scmp.eq.s32.totalorder %s23, 1
      %p124 = por %p122, %p123
      %p126 = scmp.ne.s32.totalorder %s109, %s125
      %p127 = scmp.eq.s32.totalorder %s23, 0
      %p128 = por %p126, %p127
      %s129 = ssub.s32 %s17, %s24
      %p130 = scmp.eq.s32.totalorder %s129, 0
      %s132 = sadd.s32 %s131, 1
      %s133 = scalar_select %p130, %s131, %s132
      %p136 = pneg %p130
      %p137 = scmp.eq.s32.totalorder %s17, 1
      %p138 = por %p136, %p137
      %p139 = scmp.ne.s32.totalorder %s131, %s134
      %p140 = scmp.eq.s32.totalorder %s17, 0
      %p141 = por %p139, %p140
      %p142 = scmp.ne.s32.totalorder %s131, %s134
      %p143 = scmp.eq.s32.totalorder %s22, 1
      %p144 = por %p142, %p143
      %p145 = scmp.ne.s32.totalorder %s134, %s135
      %p146 = scmp.eq.s32.totalorder %s22, 0
      %p147 = por %p145, %p146
      %p148 = scmp.ne.s32.totalorder %s134, %s135
      %p149 = scmp.eq.s32.totalorder %s23, 1
      %p150 = por %p148, %p149
      %p152 = scmp.ne.s32.totalorder %s135, %s151
      %p153 = scmp.eq.s32.totalorder %s23, 0
      %p154 = por %p152, %p153
      %p155 = scmp.le.s32.totalorder 1, %s17
      %p156 = scmp.lt.s32.totalorder %s17, 3
      %p157 = pnand %p155, %p156
      %p158 = pneg %p157
      // Predicated region
      $region9: #{tpu_custom_call.1} parent=5 // pred_check
        _
      $region10: #{tpu_custom_call.1} parent=5 // pred_check_branch
        %160 = sbr.rel (%p157) target = $region12
      $region11: #{tpu_custom_call.1} parent=5 // pred_region
        %s161 = ssub.s32 %s17, 1
      $region12: #{tpu_custom_call.1} parent=5 // pred_fallthru
        _
      %p162 = scmp.lt.s32.totalorder %s17, 2
      // Predicated region
      $region13: #{tpu_custom_call.1} parent=5 // pred_check
        %p163 = pneg %p162
      $region14: #{tpu_custom_call.1} parent=5 // pred_check_branch
        %165 = sbr.rel (%p163) target = $region16
      $region15: #{tpu_custom_call.1} parent=5 // pred_region
        // Predicated region
        $region17: #{tpu_custom_call.1} parent=15 // pred_check
          %p166 = pneg %p37
        $region18: #{tpu_custom_call.1} parent=15 // pred_check_branch
          %168 = sbr.rel (%p166) target = $region20
        $region19: #{tpu_custom_call.1} parent=15 // pred_region
          %p169 = scmp.lt.s32.totalorder %s17, 1
          %s170 = scalar_select %p169, %s17, 1
          %s171 = smul.addr %s170, 8
          %s172 = scalar_lea.vmem %s0, %s171
        $region20: #{tpu_custom_call.1} parent=15 // pred_fallthru
          _
        // Predicated region
        $region21: #{tpu_custom_call.1} parent=15 // pred_check
          %p173 = pneg %p63
        $region22: #{tpu_custom_call.1} parent=15 // pred_check_branch
          %175 = sbr.rel (%p173) target = $region24
        $region23: #{tpu_custom_call.1} parent=15 // pred_region
          %p176 = scmp.lt.s32.totalorder %s17, 1
          %s177 = scalar_select %p176, %s17, 1
          %s178 = smul.addr %s177, 8
          %s179 = smul.addr %s178, 8
          %s180 = scalar_lea.vmem %s1, %s179
        $region24: #{tpu_custom_call.1} parent=15 // pred_fallthru
          _
        // Predicated region
        $region25: #{tpu_custom_call.1} parent=15 // pred_check
          %p181 = pneg %p89
        $region26: #{tpu_custom_call.1} parent=15 // pred_check_branch
          %183 = sbr.rel (%p181) target = $region28
        $region27: #{tpu_custom_call.1} parent=15 // pred_region
          %p184 = scmp.lt.s32.totalorder %s17, 1
          %s185 = scalar_select %p184, %s17, 1
          %s186 = smul.addr %s185, 3
          %s187 = smul.addr %s186, 8
          %s188 = scalar_lea.vmem %s2, %s187
        $region28: #{tpu_custom_call.1} parent=15 // pred_fallthru
          _
      $region16: #{tpu_custom_call.1} parent=5 // pred_fallthru
        _
      %p189 = scmp.le.s32.totalorder 1, %s17
      %p190 = scmp.lt.s32.totalorder %s17, 3
      %p191 = pnand %p189, %p190
      %p192 = pneg %p191
      // Predicated region
      $region29: #{tpu_custom_call.1} parent=5 // pred_check
        _
      $region30: #{tpu_custom_call.1} parent=5 // pred_check_branch
        %194 = sbr.rel (%p191) target = $region32
      $region31: #{tpu_custom_call.1} parent=5 // pred_region
        %s195 = ssub.s32 %s17, 1
        %p196 = scmp.lt.s32.totalorder %s22, 1
        %s197 = scalar_select %p196, %s22, 1
        %s198 = smul.addr %s197, 8
        %s199 = scalar_lea.vmem %s0, %s198
        %p200 = pneg %p43
        %p201 = pneg %p40
        %p202 = scmp.lt.s32.totalorder %s22, 1
        %s203 = scalar_select %p202, %s22, 1
        %s204 = smul.addr %s203, 8
        %s205 = smul.addr %s204, 8
        %s206 = scalar_lea.vmem %s1, %s205
        %p207 = pneg %p69
        %p208 = pneg %p66
        %p209 = scmp.lt.s32.totalorder %s22, 1
        %s210 = scalar_select %p209, %s22, 1
        %s211 = smul.addr %s210, 3
        %s212 = smul.addr %s211, 8
        %s213 = scalar_lea.vmem %s2, %s212
        %p214 = pneg %p95
        %p215 = pneg %p92
        %p216 = pneg %p121
        %p217 = pneg %p118
        %s218 = sand.u32 %s108, 1
        %s219 = scalar_lea.sflag [#allocation6], %s218
        %s220 = sand.u32 %s108, 1
        %s221 = smul.addr %s220, 8
        %s222 = scalar_lea.vmem [#allocation5], %s221
        %p223 = pneg %p147
        %p224 = pneg %p144
        %s225 = sand.u32 %s134, 1
        %s226 = scalar_lea.sflag [#allocation8], %s225
        %s227 = sand.u32 %s134, 1
        %s228 = smul.addr %s227, 8
        %s229 = scalar_lea.vmem [#allocation7], %s228
        %p230 = scmp.lt.s32.totalorder %s22, 1
        %s231 = scalar_select %p230, %s22, 1
        %s232 = smul.addr %s231, 8
        %s233 = scalar_lea.vmem %s0, %s232
        %p234 = scmp.lt.s32.totalorder %s22, 1
        %s235 = scalar_select %p234, %s22, 1
        %s236 = smul.addr %s235, 8
        %s237 = smul.addr %s236, 8
        %s238 = scalar_lea.vmem %s1, %s237
        %p239 = scmp.lt.s32.totalorder %s22, 1
        %s240 = scalar_select %p239, %s22, 1
        %s241 = smul.addr %s240, 3
        %s242 = smul.addr %s241, 8
        %s243 = scalar_lea.vmem %s2, %s242
        %v244 = vld [vmem:[%s243] sm:$0xff]
        %v245 = vld [vmem:[%s243 + $0x8] sm:$0xff]
        %v246 = vld [vmem:[%s243 + $0x10] sm:$0xff]
        %v247 = vmul.f32 %v244, %v244
        %v248 = vmul.f32 %v245, %v245
        %v249 = vadd.f32 %v247, %v248
        %v250 = vmul.f32 %v246, %v246
        %v251 = vadd.f32 %v249, %v250
        %v252 = vlaneseq
        %v253 = vshrl.u32 %v252, 7
        %v254 = vmul.u32 %v253, 8
        %v255 = vlaneseq
        %v256 = vand.u32 %v255, 127
        %v257 = vadd.s32 %v254, %v256
        %v258 = vsub.s32 63, %v257
        loop: start=0, step=1, limit=8
        $region33: #{tpu_custom_call.1} parent=31 // loop_pre_header
          _
        $region34: #{tpu_custom_call.1} parent=31 // loop_header
          %s260 = sphi 0, %s264
          %p261 = scmp.ge.s32.totalorder %s260, 8
          %s265 = sphi 0, %s340
          %v266 = vphi inf, %v309
        $region35: #{tpu_custom_call.1} parent=31 // loop_header_branch
          %263 = sbr.rel (%p261) target = $region39
        $region36: #{tpu_custom_call.1} parent=31 // loop_body
          %s267 = scalar_lea.vmem %s238, %s265
          %v268 = vld [vmem:[%s267] sm:$0x1]
          %s269 = scalar_lea.vmem [#allocation3], %s260
          %vm270 = vcmask 57344
          %271 = vst.msk [vmem:[%s269] sm:$0x1] %vm270, %v268
          %s273 = vtos %v268
          %v274 = vstv %s273
          %v276 = vmul.f32 %v274, %v244
          %277 = vrot.lane.b32.xlu0 %v268, 127
          %v278 = vpop.permute.xlu0 %277
          %s279 = vtos %v278
          %v280 = vstv %s279
          %v282 = vmul.f32 %v280, %v245
          %v283 = vadd.f32 %v276, %v282
          %284 = vrot.lane.b32.xlu0 %v268, 126
          %v285 = vpop.permute.xlu0 %284
          %s286 = vtos %v285
          %v287 = vstv %s286
          %v289 = vmul.f32 %v287, %v246
          %v290 = vadd.f32 %v283, %v289
          %v291 = vmul.f32 %v268, %v268
          %293 = vrot.lane.b32.xlu0 %v291, 127
          %v294 = vpop.permute.xlu0 %293
          %v296 = vadd.f32 %v291, %v294
          %297 = vrot.lane.b32.xlu0 %v291, 126
          %v298 = vpop.permute.xlu0 %297
          %v300 = vadd.f32 %v296, %v298
          %s302 = vtos %v300
          %v303 = vstv %s302
          %v305 = vadd.f32 %v251, %v303
          %v306 = vmul.f32 %v290, 2.0
          %v307 = vsub.f32 %v305, %v306
          %v308 = vmax.f32 %v307, 0.0
          %v309 = vmin.f32 %v266, %v308
          %v311 = vand.u32 %v309, 4294967232
          %v312 = vor.u32 %v311, %v258
          %vm313 = vcmask 64512
          %v314 = vsel %vm313, %v312, 2147483648
          %v315 = vand.u32 %v314, 65535
          %v316 = vshra.s32 %v314, 16
          %v317 = vcvt.s32.f32 %v315
          %v318 = vcvt.s32.f32 %v316
          %319 = vmax.xlane.f32.xlu0 %v318
          %v320 = vpop.xlane.xlu0 %319
          %vm321 = vcmp.eq.f32.partialorder %v318, %v320
          %v322 = vsel %vm321, %v317, -inf
          %323 = vmax.xlane.f32.xlu0 %v322
          %v324 = vpop.xlane.xlu0 %323
          %v325 = vcvt.f32.s32 %v324
          %v326 = vcvt.f32.s32 %v320
          %v327 = vshll.u32 %v326, 16
          %v328 = vadd.s32 %v327, %v325
          %v329 = vrot.slane %v328, 4
          %vm330 = vcmp.gt.s32.totalorder %v328, %v329
          %v331 = vsel %vm330, %v328, %v329
          %v332 = vrot.slane %v331, 2
          %vm333 = vcmp.gt.s32.totalorder %v331, %v332
          %v334 = vsel %vm333, %v331, %v332
          %v335 = vrot.slane %v334, 1
          %vm336 = vcmp.gt.s32.totalorder %v334, %v335
          %v337 = vsel %vm336, %v334, %v335
          %s338 = vtos %v337
          %s339 = sand.u32 %s338, 63
          %s340 = ssub.s32 63, %s339
        $region37: #{tpu_custom_call.1} parent=31 // loop_footer
          %s264 = sadd.s32 1, %s260
        $region38: #{tpu_custom_call.1} parent=31 // loop_footer_branch
          %259 = sbr.rel target = $region34
        $region39: #{tpu_custom_call.1} parent=31 // loop_exit
          _
        %v341 = vld [vmem:[#allocation3] sm:$0xff]
        %v342 = vld [vmem:[%s233] sm:$0xff]
        %v343 = vmul.f32 %v342, %v342
        %vm344 = vcmask 523264
        %v345 = vsel %vm344, %v343, 0.0
        %v346 = vrot.slane %v345, 4
        %v347 = vadd.f32 %v345, %v346
        %v348 = vrot.slane %v347, 2
        %v349 = vadd.f32 %v347, %v348
        %v350 = vrot.slane %v349, 1
        %v351 = vadd.f32 %v349, %v350
        %v352 = vmul.f32 %v341, %v341
        %vm353 = vcmask 64512
        %v354 = vsel %vm353, %v352, 0.0
        %355 = vadd.xlane.f32.xlu0 %v354
        %v356 = vpop.xlane.xlu0 %355
        %v357 = vadd.f32 %v356, %v351
        %v359 = vsel %vm353, %v341, 0
        %361 = vmatpush.msra.mxu0 0.0
        %362 = vmatpush.msra.mxu0 0.0
        %363 = vmatpush.msra.mxu0 0.0
        %364 = vmatpush.msra.mxu0 0.0
        %365 = vmatpush.msra.mxu0 0.0
        %366 = vmatpush.msra.mxu0 0.0
        %367 = vmatpush.msra.mxu0 0.0
        %368 = vmatpush.msra.mxu0 0.0
        %369 = vmatpush.msra.mxu0 0.0
        %370 = vmatpush.msra.mxu0 0.0
        %371 = vmatpush.msra.mxu0 0.0
        %372 = vmatpush.msra.mxu0 0.0
        %373 = vmatpush.msra.mxu0 0.0
        %374 = vmatpush.msra.mxu0 0.0
        %375 = vmatpush.msra.mxu0 0.0
        %376 = vmatpush.msra.mxu0 %v342
        %377 = vmatmul.f32.gmra.mxu0 %v359
        %v378 = vpop.f32.mrf.mxu0
        %v379 = vadd.f32 0.0, %v378
        %380 = vdwg.mxu0
        %v381 = vmul.f32 %v379, 2.0
        %v382 = vsub.f32 %v357, %v381
        %v383 = vmax.f32 %v382, 0.0
        %v385 = vand.u32 %v383, 4294967232
        %v386 = vor.u32 %v385, %v256
        %v387 = vsel %vm344, %v386, 2147483647
        %v388 = vand.u32 %v387, 65535
        %v389 = vshra.s32 %v387, 16
        %v390 = vcvt.s32.f32 %v388
        %v391 = vcvt.s32.f32 %v389
        %392 = vmin.xlane.f32.xlu0 %v391
        %v393 = vpop.xlane.xlu0 %392
        %vm394 = vcmp.eq.f32.partialorder %v391, %v393
        %v395 = vsel %vm394, %v390, inf
        %396 = vmin.xlane.f32.xlu0 %v395
        %v397 = vpop.xlane.xlu0 %396
        %v398 = vcvt.f32.s32 %v397
        %v399 = vcvt.f32.s32 %v393
        %v400 = vshll.u32 %v399, 16
        %v401 = vadd.s32 %v400, %v398
        %vm402 = vcmp.eq.s32.totalorder %v256, 0
        %v403 = vand.u32 %v401, 63
        %v404 = vsel %vm402, %v403, 0
        %vm405 = vcmp.eq.s32.totalorder %v386, %v401
        %v406 = vsel %vm405, 2147483647, %v386
        %v407 = vsel %vm344, %v406, 2147483647
        %v408 = vand.u32 %v407, 65535
        %v409 = vshra.s32 %v407, 16
        %v410 = vcvt.s32.f32 %v408
        %v411 = vcvt.s32.f32 %v409
        %412 = vmin.xlane.f32.xlu0 %v411
        %v413 = vpop.xlane.xlu0 %412
        %vm414 = vcmp.eq.f32.partialorder %v411, %v413
        %v415 = vsel %vm414, %v410, inf
        %416 = vmin.xlane.f32.xlu0 %v415
        %v417 = vpop.xlane.xlu0 %416
        %v418 = vcvt.f32.s32 %v417
        %v419 = vcvt.f32.s32 %v413
        %v420 = vshll.u32 %v419, 16
        %v421 = vadd.s32 %v420, %v418
        %vm422 = vcmp.eq.s32.totalorder %v256, 1
        %v423 = vand.u32 %v421, 63
        %v424 = vsel %vm422, %v423, %v404
        %vm425 = vcmp.eq.s32.totalorder %v406, %v421
        %v426 = vsel %vm425, 2147483647, %v406
        %v427 = vsel %vm344, %v426, 2147483647
        %v428 = vand.u32 %v427, 65535
        %v429 = vshra.s32 %v427, 16
        %v430 = vcvt.s32.f32 %v428
        %v431 = vcvt.s32.f32 %v429
        %432 = vmin.xlane.f32.xlu0 %v431
        %v433 = vpop.xlane.xlu0 %432
        %vm434 = vcmp.eq.f32.partialorder %v431, %v433
        %v435 = vsel %vm434, %v430, inf
        %436 = vmin.xlane.f32.xlu0 %v435
        %v437 = vpop.xlane.xlu0 %436
        %v438 = vcvt.f32.s32 %v437
        %v439 = vcvt.f32.s32 %v433
        %v440 = vshll.u32 %v439, 16
        %v441 = vadd.s32 %v440, %v438
        %vm442 = vcmp.eq.s32.totalorder %v256, 2
        %v443 = vand.u32 %v441, 63
        %v444 = vsel %vm442, %v443, %v424
        %vm445 = vcmp.eq.s32.totalorder %v426, %v441
        %v446 = vsel %vm445, 2147483647, %v426
        %v447 = vsel %vm344, %v446, 2147483647
        %v448 = vand.u32 %v447, 65535
        %v449 = vshra.s32 %v447, 16
        %v450 = vcvt.s32.f32 %v448
        %v451 = vcvt.s32.f32 %v449
        %452 = vmin.xlane.f32.xlu0 %v451
        %v453 = vpop.xlane.xlu0 %452
        %vm454 = vcmp.eq.f32.partialorder %v451, %v453
        %v455 = vsel %vm454, %v450, inf
        %456 = vmin.xlane.f32.xlu0 %v455
        %v457 = vpop.xlane.xlu0 %456
        %v458 = vcvt.f32.s32 %v457
        %v459 = vcvt.f32.s32 %v453
        %v460 = vshll.u32 %v459, 16
        %v461 = vadd.s32 %v460, %v458
        %vm462 = vcmp.eq.s32.totalorder %v256, 3
        %v463 = vand.u32 %v461, 63
        %v464 = vsel %vm462, %v463, %v444
        %vm465 = vcmp.eq.s32.totalorder %v446, %v461
        %v466 = vsel %vm465, 2147483647, %v446
        %v467 = vsel %vm344, %v466, 2147483647
        %v468 = vand.u32 %v467, 65535
        %v469 = vshra.s32 %v467, 16
        %v470 = vcvt.s32.f32 %v468
        %v471 = vcvt.s32.f32 %v469
        %472 = vmin.xlane.f32.xlu0 %v471
        %v473 = vpop.xlane.xlu0 %472
        %vm474 = vcmp.eq.f32.partialorder %v471, %v473
        %v475 = vsel %vm474, %v470, inf
        %476 = vmin.xlane.f32.xlu0 %v475
        %v477 = vpop.xlane.xlu0 %476
        %v478 = vcvt.f32.s32 %v477
        %v479 = vcvt.f32.s32 %v473
        %v480 = vshll.u32 %v479, 16
        %v481 = vadd.s32 %v480, %v478
        %vm482 = vcmp.eq.s32.totalorder %v256, 4
        %v483 = vand.u32 %v481, 63
        %v484 = vsel %vm482, %v483, %v464
        %vm485 = vcmp.eq.s32.totalorder %v466, %v481
        %v486 = vsel %vm485, 2147483647, %v466
        %v487 = vsel %vm344, %v486, 2147483647
        %v488 = vand.u32 %v487, 65535
        %v489 = vshra.s32 %v487, 16
        %v490 = vcvt.s32.f32 %v488
        %v491 = vcvt.s32.f32 %v489
        %492 = vmin.xlane.f32.xlu0 %v491
        %v493 = vpop.xlane.xlu0 %492
        %vm494 = vcmp.eq.f32.partialorder %v491, %v493
        %v495 = vsel %vm494, %v490, inf
        %496 = vmin.xlane.f32.xlu0 %v495
        %v497 = vpop.xlane.xlu0 %496
        %v498 = vcvt.f32.s32 %v497
        %v499 = vcvt.f32.s32 %v493
        %v500 = vshll.u32 %v499, 16
        %v501 = vadd.s32 %v500, %v498
        %vm502 = vcmp.eq.s32.totalorder %v256, 5
        %v503 = vand.u32 %v501, 63
        %v504 = vsel %vm502, %v503, %v484
        %vm505 = vcmp.eq.s32.totalorder %v486, %v501
        %v506 = vsel %vm505, 2147483647, %v486
        %v507 = vsel %vm344, %v506, 2147483647
        %v508 = vand.u32 %v507, 65535
        %v509 = vshra.s32 %v507, 16
        %v510 = vcvt.s32.f32 %v508
        %v511 = vcvt.s32.f32 %v509
        %512 = vmin.xlane.f32.xlu0 %v511
        %v513 = vpop.xlane.xlu0 %512
        %vm514 = vcmp.eq.f32.partialorder %v511, %v513
        %v515 = vsel %vm514, %v510, inf
        %516 = vmin.xlane.f32.xlu0 %v515
        %v517 = vpop.xlane.xlu0 %516
        %v518 = vcvt.f32.s32 %v517
        %v519 = vcvt.f32.s32 %v513
        %v520 = vshll.u32 %v519, 16
        %v521 = vadd.s32 %v520, %v518
        %vm522 = vcmp.eq.s32.totalorder %v256, 6
        %v523 = vand.u32 %v521, 63
        %v524 = vsel %vm522, %v523, %v504
        %vm525 = vcmp.eq.s32.totalorder %v506, %v521
        %v526 = vsel %vm525, 2147483647, %v506
        %v527 = vsel %vm344, %v526, 2147483647
        %v528 = vand.u32 %v527, 65535
        %v529 = vshra.s32 %v527, 16
        %v530 = vcvt.s32.f32 %v528
        %v531 = vcvt.s32.f32 %v529
        %532 = vmin.xlane.f32.xlu0 %v531
        %v533 = vpop.xlane.xlu0 %532
        %vm534 = vcmp.eq.f32.partialorder %v531, %v533
        %v535 = vsel %vm534, %v530, inf
        %536 = vmin.xlane.f32.xlu0 %v535
        %v537 = vpop.xlane.xlu0 %536
        %v538 = vcvt.f32.s32 %v537
        %v539 = vcvt.f32.s32 %v533
        %v540 = vshll.u32 %v539, 16
        %v541 = vadd.s32 %v540, %v538
        %vm542 = vcmp.eq.s32.totalorder %v256, 7
        %v543 = vand.u32 %v541, 63
        %v544 = vsel %vm542, %v543, %v524
        %545 = vst.msk [vmem:[#allocation4] sm:$0xff] %vm353, %v544
        %546 = vxpose.xlu0.b32.start [1/16] %v341, 128
        %547 = vxpose.xlu0.b32.cont [2/16] 0.0, 128
        %548 = vxpose.xlu0.b32.cont [3/16] 0.0, 128
        %549 = vxpose.xlu0.b32.cont [4/16] 0.0, 128
        %550 = vxpose.xlu0.b32.cont [5/16] 0.0, 128
        %551 = vxpose.xlu0.b32.cont [6/16] 0.0, 128
        %552 = vxpose.xlu0.b32.cont [7/16] 0.0, 128
        %553 = vxpose.xlu0.b32.cont [8/16] 0.0, 128
        %554 = vxpose.xlu0.b32.cont [9/16] 0.0, 128
        %555 = vxpose.xlu0.b32.cont [10/16] 0.0, 128
        %556 = vxpose.xlu0.b32.cont [11/16] 0.0, 128
        %557 = vxpose.xlu0.b32.cont [12/16] 0.0, 128
        %558 = vxpose.xlu0.b32.cont [13/16] 0.0, 128
        %559 = vxpose.xlu0.b32.cont [14/16] 0.0, 128
        %560 = vxpose.xlu0.b32.cont [15/16] 0.0, 128
        %561 = vxpose.xlu0.b32.end [16/16] 0.0, 128
        %v562 = vpop.trf.xlu0
        %v563 = vpop.trf.xlu0
        %v564 = vpop.trf.xlu0
        %v565 = vpop.trf.xlu0
        %v566 = vpop.trf.xlu0
        %v567 = vpop.trf.xlu0
        %v568 = vpop.trf.xlu0
        %v569 = vpop.trf.xlu0
        %v570 = vpop.trf.xlu0
        %v571 = vpop.trf.xlu0
        %v572 = vpop.trf.xlu0
        %v573 = vpop.trf.xlu0
        %v574 = vpop.trf.xlu0
        %v575 = vpop.trf.xlu0
        %v576 = vpop.trf.xlu0
        %v577 = vpop.trf.xlu0
        %578 = vmatpush.msra.mxu0 0.0
        %579 = vmatpush.msra.mxu0 0.0
        %580 = vmatpush.msra.mxu0 0.0
        %581 = vmatpush.msra.mxu0 0.0
        %582 = vmatpush.msra.mxu0 0.0
        %583 = vmatpush.msra.mxu0 0.0
        %584 = vmatpush.msra.mxu0 0.0
        %585 = vmatpush.msra.mxu0 0.0
        %586 = vmatpush.msra.mxu0 0.0
        %587 = vmatpush.msra.mxu0 0.0
        %588 = vmatpush.msra.mxu0 0.0
        %589 = vmatpush.msra.mxu0 0.0
        %590 = vmatpush.msra.mxu0 0.0
        %591 = vmatpush.msra.mxu0 0.0
        %592 = vmatpush.msra.mxu0 0.0
        %593 = vmatpush.msra.mxu0 %v562
        %594 = vmatmul.f32.gmra.mxu0 %v359
        %v595 = vpop.f32.mrf.mxu0
        %v596 = vadd.f32 0.0, %v595
        %597 = vdwg.mxu0
        %v598 = vmul.f32 %v562, %v562
        %v599 = vsel %vm353, %v598, 0.0
        %v600 = vrot.slane %v599, 4
        %v601 = vadd.f32 %v599, %v600
        %v602 = vrot.slane %v601, 2
        %v603 = vadd.f32 %v601, %v602
        %v604 = vrot.slane %v603, 1
        %v605 = vadd.f32 %v603, %v604
        %v606 = vadd.f32 %v356, %v605
        %v607 = vmul.f32 %v596, 2.0
        %v608 = vsub.f32 %v606, %v607
        %v609 = vmax.f32 %v608, 0.0
        %610 = vst.msk [vmem:[#allocation2] sm:$0xff] %vm353, %v609
        %vm611 = vcmask 57344
        %612 = vst.msk [vmem:[%s222] sm:$0x1] %vm611, %v341
        %613 = vst.msk [vmem:[%s229] sm:$0x1] %vm611, %v544
        %v614 = vsel %vm402, 1, 0
        loop: start=1, step=1, limit=8
        $region40: #{tpu_custom_call.1} parent=31 // loop_pre_header
          _
        $region41: #{tpu_custom_call.1} parent=31 // loop_header
          %s616 = sphi 1, %s620
          %p617 = scmp.ge.s32.totalorder %s616, 8
          %s621 = sphi 0, %s655
          %v622 = vphi %v614, %v659
        $region42: #{tpu_custom_call.1} parent=31 // loop_header_branch
          %619 = sbr.rel (%p617) target = $region46
        $region43: #{tpu_custom_call.1} parent=31 // loop_body
          %s623 = scalar_lea.vmem [#allocation2], %s621
          %v624 = vld [vmem:[%s623] sm:$0x1]
          %vm625 = vcmp.gt.s32.totalorder %v622, 0
          %v627 = vand.u32 %v624, 4294967288
          %v628 = vor.u32 %v627, %v256
          %v629 = vsel %vm625, 2147483647, %v628
          %v630 = vsel %vm611, %v629, 2147483647
          %v631 = vand.u32 %v630, 65535
          %v632 = vshra.s32 %v630, 16
          %v633 = vcvt.s32.f32 %v631
          %v634 = vcvt.s32.f32 %v632
          %635 = vmin.xlane.f32.xlu0 %v634
          %v636 = vpop.xlane.xlu0 %635
          %vm637 = vcmp.eq.f32.partialorder %v634, %v636
          %v638 = vsel %vm637, %v633, inf
          %639 = vmin.xlane.f32.xlu0 %v638
          %v640 = vpop.xlane.xlu0 %639
          %v641 = vcvt.f32.s32 %v640
          %v642 = vcvt.f32.s32 %v636
          %v643 = vshll.u32 %v642, 16
          %v644 = vadd.s32 %v643, %v641
          %v645 = vrot.slane %v644, 4
          %vm646 = vcmp.lt.s32.totalorder %v644, %v645
          %v647 = vsel %vm646, %v644, %v645
          %v648 = vrot.slane %v647, 2
          %vm649 = vcmp.lt.s32.totalorder %v647, %v648
          %v650 = vsel %vm649, %v647, %v648
          %v651 = vrot.slane %v650, 1
          %vm652 = vcmp.lt.s32.totalorder %v650, %v651
          %v653 = vsel %vm652, %v650, %v651
          %s654 = vtos %v653
          %s655 = sand.u32 %s654, 7
          %v656 = vstv %s655
          %vm657 = vcmp.eq.s32.totalorder %v256, %v656
          %v658 = vsel %vm657, 1, 0
          %v659 = vor.u32 %v622, %v658
          %s660 = scalar_lea.vmem [#allocation3], %s655
          %v661 = vld [vmem:[%s660] sm:$0x1]
          %s662 = scalar_lea.vmem %s222, %s616 [#allocation5]
          %663 = vst.msk [vmem:[%s662] sm:$0x1] %vm611, %v661
          %s664 = scalar_lea.vmem [#allocation4], %s655
          %v665 = vld [vmem:[%s664] sm:$0x1]
          %s666 = scalar_lea.vmem %s229, %s616 [#allocation7]
          %667 = vst.msk [vmem:[%s666] sm:$0x1] %vm611, %v665
        $region44: #{tpu_custom_call.1} parent=31 // loop_footer
          %s620 = sadd.s32 1, %s616
        $region45: #{tpu_custom_call.1} parent=31 // loop_footer_branch
          %615 = sbr.rel target = $region41
        $region46: #{tpu_custom_call.1} parent=31 // loop_exit
          _
        %s668 = sand.u32 %s108, 1
        %s669 = scalar_lea.sflag [#allocation6], %s668
        %s670 = sand.u32 %s108, 1
        %s671 = smul.addr %s670, 8
        %s672 = scalar_lea.vmem [#allocation5], %s671
        %s673 = sand.u32 %s134, 1
        %s674 = scalar_lea.sflag [#allocation8], %s673
        %s675 = sand.u32 %s134, 1
        %s676 = smul.addr %s675, 8
        %s677 = scalar_lea.vmem [#allocation7], %s676
        // Predicated region
        $region47: #{tpu_custom_call.1} parent=31 // pred_check
          %p678 = pneg %p118
        $region48: #{tpu_custom_call.1} parent=31 // pred_check_branch
          %680 = sbr.rel (%p678) target = $region50
        $region49: #{tpu_custom_call.1} parent=31 // pred_region
          %682 = vsyncadd %s669, 0
          %s683 = smul.addr %s22, 8
          %s684 = scalar_lea.hbm %s3, %s683
          %s686 = sshll.u32 %s672, 4
          %s687 = int_to_ptr.vmem [resolvable:$true] %s686
          %s688 = sshll.u32 %s684, 4
          %s689 = int_to_ptr.hbm [resolvable:$true] %s688
          %691 = dma.vmem_to_hbm [thread:$0]  %s687, 128, %s689, %s669
        $region50: #{tpu_custom_call.1} parent=31 // pred_fallthru
          _
        // Predicated region
        $region51: #{tpu_custom_call.1} parent=31 // pred_check
          %p692 = pneg %p144
        $region52: #{tpu_custom_call.1} parent=31 // pred_check_branch
          %694 = sbr.rel (%p692) target = $region54
        $region53: #{tpu_custom_call.1} parent=31 // pred_region
          %696 = vsyncadd %s674, 0
          %s697 = smul.addr %s22, 8
          %s698 = scalar_lea.hbm %s4, %s697
          %s700 = sshll.u32 %s677, 4
          %s701 = int_to_ptr.vmem [resolvable:$true] %s700
          %s702 = sshll.u32 %s698, 4
          %s703 = int_to_ptr.hbm [resolvable:$true] %s702
          %705 = dma.vmem_to_hbm [thread:$0]  %s701, 128, %s703, %s674
        $region54: #{tpu_custom_call.1} parent=31 // pred_fallthru
          _
      $region32: #{tpu_custom_call.1} parent=5 // pred_fallthru
        _
      %p706 = scmp.le.s32.totalorder 2, %s17
      // Predicated region
      $region55: #{tpu_custom_call.1} parent=5 // pred_check
        %p707 = pneg %p706
      $region56: #{tpu_custom_call.1} parent=5 // pred_check_branch
        %709 = sbr.rel (%p707) target = $region58
      $region57: #{tpu_custom_call.1} parent=5 // pred_region
        %s710 = ssub.s32 %s17, 2
        // Predicated region
        $region59: #{tpu_custom_call.1} parent=57 // pred_check
          %p711 = pneg %p124
        $region60: #{tpu_custom_call.1} parent=57 // pred_check_branch
          %713 = sbr.rel (%p711) target = $region62
        $region61: #{tpu_custom_call.1} parent=57 // pred_region
          %s714 = sand.u32 %s109, 1
          %s715 = scalar_lea.sflag [#allocation6], %s714
          %s716 = sand.u32 %s109, 1
          %s717 = smul.addr %s716, 8
          %s718 = scalar_lea.vmem [#allocation5], %s717
          %720 = dma.done %s715, 128
        $region62: #{tpu_custom_call.1} parent=57 // pred_fallthru
          _
        // Predicated region
        $region63: #{tpu_custom_call.1} parent=57 // pred_check
          %p721 = pneg %p150
        $region64: #{tpu_custom_call.1} parent=57 // pred_check_branch
          %723 = sbr.rel (%p721) target = $region66
        $region65: #{tpu_custom_call.1} parent=57 // pred_region
          %s724 = sand.u32 %s135, 1
          %s725 = scalar_lea.sflag [#allocation8], %s724
          %s726 = sand.u32 %s135, 1
          %s727 = smul.addr %s726, 8
          %s728 = scalar_lea.vmem [#allocation7], %s727
          %730 = dma.done %s725, 128
        $region66: #{tpu_custom_call.1} parent=57 // pred_fallthru
          _
      $region58: #{tpu_custom_call.1} parent=5 // pred_fallthru
        _
    $region6: #{tpu_custom_call.1} parent=1 // loop_footer
      %s21 = sadd.s32 1, %s17
    $region7: #{tpu_custom_call.1} parent=1 // loop_footer_branch
      %16 = sbr.rel target = $region3
    $region8: #{tpu_custom_call.1} parent=1 // loop_exit
      _
    %731 = vsyncpa [#allocation6], 1
    %s732 = scalar_lea.sflag [#allocation6], 1
    %733 = vsyncpa %s732, 1
    %734 = vsyncpa [#allocation8], 1
    %s735 = scalar_lea.sflag [#allocation8], 1
    %736 = vsyncpa %s735, 1

</llo_original>
